<compile_context>
chip_gen: v6e
topology: v6e:2x2x1
jax: 0.10.0
libtpu: 0.0.40
codegen_flags: <defaults>
</compile_context>

<pallas_src>
import jax
import jax.numpy as jnp
from jax.experimental import pallas as pl
from jax.experimental.pallas import tpu as pltpu


def _round_up(x, m):
    return ((x + m - 1) // m) * m


def _choose_tile(size, unit, target):
    """Return (padded_size, tile).

    padded_size = `size` rounded up to a multiple of `unit` (the (8,128) layout
    minimum); tile divides padded_size, is a multiple of `unit`, and is as close
    to `target` as possible.  Only if the divisors of the minimally-padded size
    are all tiny do we pad a bit more (per-grid-step overhead ~0.35 us).
    """
    target = max(unit, _round_up(target, unit))
    size_p = _round_up(size, unit)
    if size_p <= target:
        return size_p, size_p
    m, t = size_p // unit, target // unit
    best = max(d for d in range(1, t + 1) if m % d == 0)
    tile = best * unit
    if tile * 4 < target:
        size_p = _round_up(size, target)
        tile = target
    return size_p, tile


def _largest_divisor_tile(total, unit, target):
    """Largest multiple of `unit` dividing `total`, not exceeding max(target, unit)."""
    m = total // unit
    t = max(1, target // unit)
    best = 1
    for d in range(1, min(m, t) + 1):
        if m % d == 0:
            best = d
    return best * unit


def _vmem_budget_bytes():
    """Generation-aware VMEM budget: ~80% of physical VMEM per core.

    v5e/v6e: 128 MiB -> ~102 MiB budget; v7x: 64 MiB/TC -> ~51 MiB budget.
    """
    try:
        cap = int(pltpu.get_tpu_info().vmem_capacity_bytes)
    except Exception:
        cap = 64 << 20  # conservative fallback (fits v7x)
    return max(16 << 20, int(cap * 0.8)), cap


# ---------- pass A: XC = X @ softmax(C), reduction over the n_col axis of X ----------
def _xc_kernel(x_ref, c_ref, o_ref):
    # Output block index_map is constant in k -> o_ref is resident across the
    # reduction axis and doubles as the accumulator.
    @pl.when(pl.program_id(1) == 0)
    def _():
        o_ref[...] = jnp.zeros_like(o_ref)

    o_ref[...] += jnp.dot(x_ref[...], c_ref[...], preferred_element_type=jnp.float32)


# ---------- pass B: out = XC @ softmax(S), lane-dense output tiles --------------------
def _out_kernel(xc_ref, s_ref, o_ref):
    # softmax(S, dim=0) reduces over the rank axis, fully contained in this
    # (rank, tn) block, so the per-block softmax equals the global one.
    s = s_ref[...]
    s = s - jnp.max(s, axis=0, keepdims=True)
    s_exp = jnp.exp(s)
    s_sm = s_exp / jnp.sum(s_exp, axis=0, keepdims=True)  # exact divide (off critical path)
    o_ref[...] = jnp.dot(xc_ref[...], s_sm, preferred_element_type=jnp.float32).astype(
        o_ref.dtype
    )


def torch_aa_forward(X, C, S, *, tm=512, tk=2048, tn=2048):
    """out = X @ softmax(C, axis=0) @ softmax(S, axis=0), computed on TPU via Pallas."""
    n_row, n_col = X.shape
    rank = C.shape[1]
    assert C.shape == (n_col, rank) and S.shape == (rank, n_col)

    budget, cap = _vmem_budget_bytes()

    # ---- tiles / padded shapes (pad only to the (8,128) layout minimum) -------------
    n_row_p, tm = _choose_tile(n_row, 8, tm)
    n_col_pa, tk = _choose_tile(n_col, 128, tk)   # X / softmax(C) padding  (pass A)
    n_col_pb, tn = _choose_tile(n_col, 128, tn)   # softmax(S) / out padding (pass B)

    def vmem_a(tm_, tk_):
        # double-buffered X chunk + C slice, resident XC accumulator (count 2x to be safe)
        return 4 * (2 * tm_ * tk_ + 2 * tk_ * rank + 2 * tm_ * rank)

    def vmem_b(tm_, tn_):
        return 4 * (2 * tm_ * rank + 2 * rank * tn_ + 2 * tm_ * tn_)

    # Shrink tiles against the generation-aware budget (rarely triggers at defaults;
    # streaming X means VMEM use is bounded by the tiles, never by n_col).
    while vmem_a(tm, tk) > budget and (tk > 128 or tm > 8):
        if tk > 128:
            tk = _largest_divisor_tile(n_col_pa, 128, tk // 2)
        else:
            tm = _largest_divisor_tile(n_row_p, 8, tm // 2)
    while vmem_b(tm, tn) > budget and (tn > 128 or tm > 8):
        if tn > 128:
            tn = _largest_divisor_tile(n_col_pb, 128, tn // 2)
        else:
            tm = _largest_divisor_tile(n_row_p, 8, tm // 2)

    # vmem_limit = estimate + headroom (no double-hedging), capped at physical VMEM.
    vmem_limit_a = int(min(cap, max(32 << 20, vmem_a(tm, tk) + (4 << 20))))
    vmem_limit_b = int(min(cap, max(32 << 20, vmem_b(tm, tn) + (4 << 20))))

    # ---- hoist softmax(C) (tiny n_col x rank op) and pad only when needed ------------
    Xf = X.astype(jnp.float32)
    Csm = jax.nn.softmax(C.astype(jnp.float32), axis=0)   # exact, computed once
    Sf = S.astype(jnp.float32)

    if (n_row_p, n_col_pa) != Xf.shape:
        Xp = jnp.zeros((n_row_p, n_col_pa), jnp.float32).at[:n_row, :n_col].set(Xf)
    else:
        Xp = Xf
    if n_col_pa != n_col:
        # zero-padded rows of softmax(C) pair with zero-padded X columns -> no effect.
        Cp = jnp.zeros((n_col_pa, rank), jnp.float32).at[:n_col, :].set(Csm)
    else:
        Cp = Csm
    if n_col_pb != n_col:
        # zero-padded S columns produce padded output columns that are sliced away.
        Sp = jnp.zeros((rank, n_col_pb), jnp.float32).at[:, :n_col].set(Sf)
    else:
        Sp = Sf

    # ---- pass A: XC = X @ softmax(C) --------------------------------------------------
    grid_a = (n_row_p // tm, n_col_pa // tk)
    xc = pl.pallas_call(
        _xc_kernel,
        out_shape=jax.ShapeDtypeStruct((n_row_p, rank), jnp.float32),
        grid_spec=pltpu.PrefetchScalarGridSpec(
            num_scalar_prefetch=0,
            grid=grid_a,
            in_specs=[
                # X streamed in (tm, tk) chunks -> no full-width slab in VMEM.
                pl.BlockSpec((tm, tk), lambda i, k: (i, k)),
                # Matching k-slice of softmax(C).
                pl.BlockSpec((tk, rank), lambda i, k: (k, 0)),
            ],
            # Resident accumulator across the reduction axis.
            out_specs=pl.BlockSpec((tm, rank), lambda i, k: (i, 0)),
        ),
        compiler_params=pltpu.CompilerParams(
            # Axis 1 is a reduction into a resident output block: it MUST stay
            # sequential ("arbitrary"); never mark it "parallel".
            dimension_semantics=("parallel", "arbitrary"),
            vmem_limit_bytes=vmem_limit_a,
        ),
    )(Xp, Cp)

    # ---- pass B: out = XC @ softmax(S) ------------------------------------------------
    grid_b = (n_row_p // tm, n_col_pb // tn)
    out_p = pl.pallas_call(
        _out_kernel,
        out_shape=jax.ShapeDtypeStruct((n_row_p, n_col_pb), jnp.float32),
        grid_spec=pltpu.PrefetchScalarGridSpec(
            num_scalar_prefetch=0,
            grid=grid_b,
            in_specs=[
                # Tiny XC row block, resident across all column tiles of a row.
                pl.BlockSpec((tm, rank), lambda i, j: (i, 0)),
                # S column slice for the current lane-dense output tile.
                pl.BlockSpec((rank, tn), lambda i, j: (0, j)),
            ],
            out_specs=pl.BlockSpec((tm, tn), lambda i, j: (i, j)),
        ),
        compiler_params=pltpu.CompilerParams(
            dimension_semantics=("parallel", "parallel"),  # fully independent tiles
            vmem_limit_bytes=vmem_limit_b,
        ),
    )(xc, Sp)

    if (n_row_p, n_col_pb) != (n_row, n_col):
        out_p = out_p[:n_row, :n_col]
    return out_p


if __name__ == "__main__":
    key = jax.random.PRNGKey(0)
    k_x, k_c, k_s = jax.random.split(key, 3)

    # Small case matching the module's shapes: X (n_row, n_col), C (n_col, rank), S (rank, n_col).
    n_row, n_col, rank = 16, 32, 8
    X = jax.random.normal(k_x, (n_row, n_col), dtype=jnp.float32)
    C = jax.random.uniform(k_c, (n_col, rank), dtype=jnp.float32)
    S = jax.random.uniform(k_s, (rank, n_col), dtype=jnp.float32)

    out = jax.block_until_ready(torch_aa_forward(X, C, S))
    ref = X @ jax.nn.softmax(C, axis=0) @ jax.nn.softmax(S, axis=0)
    assert out.shape == (n_row, n_col)
    assert jnp.allclose(out, ref, atol=1e-3, rtol=1e-3), "mismatch vs reference (small case)"

    # Larger case exercising the streamed k-reduction (pass A), multi-tile output
    # grid (pass B) and row/column padding.
    n_row2, n_col2, rank2 = 96, 384, 8
    k_x2, k_c2, k_s2 = jax.random.split(jax.random.PRNGKey(1), 3)
    X2 = jax.random.normal(k_x2, (n_row2, n_col2), dtype=jnp.float32)
    C2 = jax.random.uniform(k_c2, (n_col2, rank2), dtype=jnp.float32)
    S2 = jax.random.uniform(k_s2, (rank2, n_col2), dtype=jnp.float32)

    out2 = jax.block_until_ready(torch_aa_forward(X2, C2, S2, tm=32, tk=128, tn=128))
    ref2 = X2 @ jax.nn.softmax(C2, axis=0) @ jax.nn.softmax(S2, axis=0)
    assert out2.shape == (n_row2, n_col2)
    assert jnp.allclose(out2, ref2, atol=1e-3, rtol=1e-3), "mismatch vs reference (tiled case)"

    print("KERNEL_OK")
</pallas_src>

<mosaic_0001>
module attributes {stable_mosaic.version = 11 : i64} {
  func.func @_xc_kernel(%arg0: i32, %arg1: i32, %arg2: memref<16x128xf32, #tpu.memory_space<vmem>>, %arg3: memref<128x8xf32, #tpu.memory_space<vmem>>, %arg4: memref<16x8xf32, #tpu.memory_space<vmem>>) attributes {dimension_semantics = [#tpu.dimension_semantics<parallel>, #tpu.dimension_semantics<arbitrary>], iteration_bounds = array<i64: 1, 1>, scalar_prefetch = 0 : i64, scratch_operands = 0 : i64, tpu.core_type = #tpu.core_type<tc>, window_params = [{transform_indices = @transform_0, window_bounds = array<i64: 16, 128>}, {transform_indices = @transform_1, window_bounds = array<i64: 128, 8>}, {transform_indices = @transform_2, window_bounds = array<i64: 16, 8>}]} {
    %c0_i32 = arith.constant 0 : i32
    %0 = arith.cmpi eq, %arg1, %c0_i32 : i32
    %1 = arith.extui %0 : i1 to i32
    %c0_i32_0 = arith.constant 0 : i32
    %2 = arith.cmpi ne, %1, %c0_i32_0 : i32
    scf.if %2 {
      %cst_8 = arith.constant 0.000000e+00 : f32
      %9 = vector.broadcast %cst_8 : f32 to vector<16x8xf32>
      %c0_9 = arith.constant 0 : index
      %c0_10 = arith.constant 0 : index
      %10 = vector.load %arg4[%c0_9, %c0_10] : memref<16x8xf32, #tpu.memory_space<vmem>>, vector<16x8xf32>
      tpu.vector_store %arg4[%c0_9, %c0_10], %9 {strides = array<i32>} : memref<16x8xf32, #tpu.memory_space<vmem>>, vector<16x8xf32>,
    } else {
    }
    %c0 = arith.constant 0 : index
    %c0_1 = arith.constant 0 : index
    %3 = vector.load %arg4[%c0, %c0_1] : memref<16x8xf32, #tpu.memory_space<vmem>>, vector<16x8xf32>
    %c0_2 = arith.constant 0 : index
    %c0_3 = arith.constant 0 : index
    %4 = vector.load %arg2[%c0_2, %c0_3] : memref<16x128xf32, #tpu.memory_space<vmem>>, vector<16x128xf32>
    %c0_4 = arith.constant 0 : index
    %c0_5 = arith.constant 0 : index
    %5 = vector.load %arg3[%c0_4, %c0_5] : memref<128x8xf32, #tpu.memory_space<vmem>>, vector<128x8xf32>
    %cst = arith.constant dense<0.000000e+00> : vector<16x8xf32>
    %6 = tpu.matmul %4, %5, %cst {dimension_numbers = #tpu.dot_dimension_numbers<[1], [0], [0], [1], [0, 0, 1, 1], [], []>} : vector<16x128xf32>, vector<128x8xf32>, vector<16x8xf32> -> vector<16x8xf32>
    %7 = arith.addf %3, %6 : vector<16x8xf32>
    %c0_6 = arith.constant 0 : index
    %c0_7 = arith.constant 0 : index
    %8 = vector.load %arg4[%c0_6, %c0_7] : memref<16x8xf32, #tpu.memory_space<vmem>>, vector<16x8xf32>
    tpu.vector_store %arg4[%c0_6, %c0_7], %7 {strides = array<i32>} : memref<16x8xf32, #tpu.memory_space<vmem>>, vector<16x8xf32>,
    return
  }
  func.func @transform_0(%arg0: i32, %arg1: i32) -> (i32, i32) {
    %c0_i32 = arith.constant 0 : i32
    return %arg0, %arg1 : i32, i32
  }
  func.func @transform_1(%arg0: i32, %arg1: i32) -> (i32, i32) {
    %c0_i32 = arith.constant 0 : i32
    %c0_i32_0 = arith.constant 0 : i32
    return %arg1, %c0_i32 : i32, i32
  }
  func.func @transform_2(%arg0: i32, %arg1: i32) -> (i32, i32) {
    %c0_i32 = arith.constant 0 : i32
    %c0_i32_0 = arith.constant 0 : i32
    return %arg0, %c0_i32 : i32, i32
  }
}

</mosaic_0001>

<llo_original>
// kernel: tpu_custom_call.1
$region0: #{tpu_custom_call.1}
  #allocation0 [shape = 'u32[]', space=smem, size = 0x4, offset = 0x4, fixed_abs, tag = 'smem constant byte address 0x4 - core index']
  #allocation1 [shape = 'u32[144,128]{1,0:T(1,128)}', space=vmem, size = 0x12000, scoped, tag = 'internal scratch']
  %s0 = inlined_call_operand.vmem [shape: f32[16,128], index: 0, kind: input, shape index: {}]
  %s1 = inlined_call_operand.vmem [shape: f32[128,8], index: 1, kind: input, shape index: {}]
  %s2 = inlined_call_operand.vmem [shape: f32[16,8], index: 2, kind: output, shape index: {}]
  %s3 = sld [smem:[#allocation0]]
  $region22: #{tpu_custom_call.1} parent=0
    _
  %s5 = ssub.s32 1, %s3
  %s6 = scalar_select 0, %s5, %s3
  // Predicated region
  $region2: #{tpu_custom_call.1} parent=0 // pred_check
    _
  $region3: #{tpu_custom_call.1} parent=0 // pred_check_branch
    %8 = sbr.rel (0) target = $region5
  $region4: #{tpu_custom_call.1} parent=0 // pred_region
    _
  $region5: #{tpu_custom_call.1} parent=0 // pred_fallthru
    _
  // Predicated region
  $region6: #{tpu_custom_call.1} parent=0 // pred_check
    _
  $region7: #{tpu_custom_call.1} parent=0 // pred_check_branch
    %10 = sbr.rel (0) target = $region9
  $region8: #{tpu_custom_call.1} parent=0 // pred_region
    _
  $region9: #{tpu_custom_call.1} parent=0 // pred_fallthru
    _
  %p11 = scmp.eq.s32.totalorder 0, 0
  // Predicated region
  $region10: #{tpu_custom_call.1} parent=0 // pred_check
    %p12 = pneg %p11
  $region11: #{tpu_custom_call.1} parent=0 // pred_check_branch
    %14 = sbr.rel (%p12) target = $region13
  $region12: #{tpu_custom_call.1} parent=0 // pred_region
    %vm15 = vcmask 64512
    %16 = vst.msk [vmem:[%s2] sm:$0xff] %vm15, 0.0
    %17 = vst.msk [vmem:[%s2 + $0x8] sm:$0xff] %vm15, 0.0
  $region13: #{tpu_custom_call.1} parent=0 // pred_fallthru
    _
  %v18 = vld [vmem:[%s2] sm:$0xff]
  %v19 = vld [vmem:[%s2 + $0x8] sm:$0xff]
  %v20 = vld [vmem:[%s0] sm:$0xff]
  %v21 = vld [vmem:[%s0 + $0x8] sm:$0xff]
  %v22 = vld [vmem:[%s1] sm:$0xff]
  %v23 = vld [vmem:[%s1 + $0x8] sm:$0xff]
  %v24 = vld [vmem:[%s1 + $0x10] sm:$0xff]
  %v25 = vld [vmem:[%s1 + $0x18] sm:$0xff]
  %v26 = vld [vmem:[%s1 + $0x20] sm:$0xff]
  %v27 = vld [vmem:[%s1 + $0x28] sm:$0xff]
  %v28 = vld [vmem:[%s1 + $0x30] sm:$0xff]
  %v29 = vld [vmem:[%s1 + $0x38] sm:$0xff]
  %v30 = vld [vmem:[%s1 + $0x40] sm:$0xff]
  %v31 = vld [vmem:[%s1 + $0x48] sm:$0xff]
  %v32 = vld [vmem:[%s1 + $0x50] sm:$0xff]
  %v33 = vld [vmem:[%s1 + $0x58] sm:$0xff]
  %v34 = vld [vmem:[%s1 + $0x60] sm:$0xff]
  %v35 = vld [vmem:[%s1 + $0x68] sm:$0xff]
  %v36 = vld [vmem:[%s1 + $0x70] sm:$0xff]
  %v37 = vld [vmem:[%s1 + $0x78] sm:$0xff]
  %38 = vmatprep.subr.mxu0 0.0
  %39 = vmatpush1.msra.mxu0 %v37
  %40 = vmatprep.subr.mxu0 0.0
  %41 = vmatpush1.msra.mxu0 %v36
  %42 = vmatprep.subr.mxu0 0.0
  %43 = vmatpush1.msra.mxu0 %v35
  %44 = vmatprep.subr.mxu0 0.0
  %45 = vmatpush1.msra.mxu0 %v34
  %46 = vmatprep.subr.mxu0 0.0
  %47 = vmatpush1.msra.mxu0 %v33
  %48 = vmatprep.subr.mxu0 0.0
  %49 = vmatpush1.msra.mxu0 %v32
  %50 = vmatprep.subr.mxu0 0.0
  %51 = vmatpush1.msra.mxu0 %v31
  %52 = vmatprep.subr.mxu0 0.0
  %53 = vmatpush1.msra.mxu0 %v30
  %54 = vmatprep.subr.mxu0 0.0
  %55 = vmatpush1.msra.mxu0 %v29
  %56 = vmatprep.subr.mxu0 0.0
  %57 = vmatpush1.msra.mxu0 %v28
  %58 = vmatprep.subr.mxu0 0.0
  %59 = vmatpush1.msra.mxu0 %v27
  %60 = vmatprep.subr.mxu0 0.0
  %61 = vmatpush1.msra.mxu0 %v26
  %62 = vmatprep.subr.mxu0 0.0
  %63 = vmatpush1.msra.mxu0 %v25
  %64 = vmatprep.subr.mxu0 0.0
  %65 = vmatpush1.msra.mxu0 %v24
  %66 = vmatprep.subr.mxu0 0.0
  %67 = vmatpush1.msra.mxu0 %v23
  %68 = vmatprep.subr.mxu0 0.0
  %69 = vmatpush1.msra.mxu0 %v22
  %70 = vmatprep.subr.mxu0 0.0
  %71 = vmatpush2.msra.mxu0 0.0
  %72 = vmatprep.subr.mxu0 0.0
  %73 = vmatpush2.msra.mxu0 0.0
  %74 = vmatprep.subr.mxu0 0.0
  %75 = vmatpush2.msra.mxu0 0.0
  %76 = vmatprep.subr.mxu0 0.0
  %77 = vmatpush2.msra.mxu0 0.0
  %78 = vmatprep.subr.mxu0 0.0
  %79 = vmatpush2.msra.mxu0 0.0
  %80 = vmatprep.subr.mxu0 0.0
  %81 = vmatpush2.msra.mxu0 0.0
  %82 = vmatprep.subr.mxu0 0.0
  %83 = vmatpush2.msra.mxu0 0.0
  %84 = vmatprep.subr.mxu0 0.0
  %85 = vmatpush2.msra.mxu0 0.0
  %86 = vmatprep.subr.mxu0 0.0
  %87 = vmatpush2.msra.mxu0 0.0
  %88 = vmatprep.subr.mxu0 0.0
  %89 = vmatpush2.msra.mxu0 0.0
  %90 = vmatprep.subr.mxu0 0.0
  %91 = vmatpush2.msra.mxu0 0.0
  %92 = vmatprep.subr.mxu0 0.0
  %93 = vmatpush2.msra.mxu0 0.0
  %94 = vmatprep.subr.mxu0 0.0
  %95 = vmatpush2.msra.mxu0 0.0
  %96 = vmatprep.subr.mxu0 0.0
  %97 = vmatpush2.msra.mxu0 0.0
  %98 = vmatprep.subr.mxu0 0.0
  %99 = vmatpush2.msra.mxu0 0.0
  %100 = vmatprep.subr.mxu0 0.0
  %101 = vmatpush2.msra.mxu0 0.0
  %102 = vmatprep.mubr.f32.mxu0 0.0
  %103 = vmatmul.mubr.f32.gmra.mxu0 %v20
  %v104 = vpop.f32.mrf.mxu0
  %v105 = vadd.f32 0.0, %v104
  %v106 = vpop.f32.mrf.mxu0
  %107 = vmatprep.mubr.f32.mxu0 0.0
  %108 = vmatmul.mubr.f32.gmra.mxu0 %v21
  %v109 = vpop.f32.mrf.mxu0
  %v110 = vadd.f32 0.0, %v109
  %v111 = vpop.f32.mrf.mxu0
  %112 = vdwg.mxu0
  %v113 = vadd.f32 %v18, %v105
  %v114 = vadd.f32 %v19, %v110
  %vm115 = vcmask 64512
  %116 = vst.msk [vmem:[%s2] sm:$0xff] %vm115, %v113
  %117 = vst.msk [vmem:[%s2 + $0x8] sm:$0xff] %vm115, %v114
  // Predicated region
  $region14: #{tpu_custom_call.1} parent=0 // pred_check
    _
  $region15: #{tpu_custom_call.1} parent=0 // pred_check_branch
    %119 = sbr.rel (0) target = $region17
  $region16: #{tpu_custom_call.1} parent=0 // pred_region
    _
  $region17: #{tpu_custom_call.1} parent=0 // pred_fallthru
    _
  // Predicated region
  $region18: #{tpu_custom_call.1} parent=0 // pred_check
    _
  $region19: #{tpu_custom_call.1} parent=0 // pred_check_branch
    %121 = sbr.rel (0) target = $region21
  $region20: #{tpu_custom_call.1} parent=0 // pred_region
    _
  $region21: #{tpu_custom_call.1} parent=0 // pred_fallthru
    _

</llo_original>
